<compile_context>
chip_gen: v5e
topology: v5e:2x2
jax: 0.10.0
libtpu: 0.0.40
codegen_flags: <defaults>
</compile_context>

<pallas_src>
import functools

import jax
import jax.numpy as jnp
from jax.experimental import pallas as pl
from jax.experimental.pallas import tpu as pltpu


def _attention_pool_kernel(x_ref, attn_ref, pooled_ref, attn_out_ref, *,
                           scale, bblk, num_attn, num_chan):
    A, C = num_attn, num_chan
    S = attn_ref.shape[-1]

    # ---- softmax over spatial axis on sublane-packed (bblk*A, S) rows -------
    a = attn_ref[...].astype(jnp.float32) * scale
    a_max = jnp.max(a, axis=-1, keepdims=True)
    e = jnp.exp(a - a_max)
    denom = jnp.sum(e, axis=-1, keepdims=True)
    attn = e / denom                                    # exact normalization
    attn_out_ref[...] = attn.astype(attn_out_ref.dtype)

    # ---- pooling: one batched NT contraction on the MXU ---------------------
    # pooled[b, a, c] = sum_s attn[b, a, s] * x[b, c, s]
    # Contract the shared last (lane) axis directly -> no x transpose pass;
    # x stays in its native dtype, MXU accumulates in f32.
    attn3 = attn.astype(x_ref.dtype).reshape(bblk, A, S)
    x3 = x_ref[...].reshape(bblk, C, S)
    p = jnp.einsum('bas,bcs->bac', attn3, x3,
                   preferred_element_type=jnp.float32)  # (bblk, A, C)
    # Single lane-dense slab store for the whole block.
    pooled_ref[...] = p.reshape(bblk, A * C).astype(pooled_ref.dtype)


def _round_up(v, m):
    return -(-v // m) * m


def _vmem_config():
    """Returns (vmem_limit_bytes, per-step block budget, prefer_multi_step)."""
    try:
        kind = jax.devices()[0].device_kind.lower()
    except Exception:
        kind = ""
    big_vmem_single_core = any(
        t in kind for t in ("v5 lite", "v5e", "v6 lite", "v6e", "trillium"))
    if big_vmem_single_core:
        # 128 MiB VMEM, one TensorCore: biggest block that fits, ideally one
        # grid step (each step costs ~0.35 us of pure pipeline overhead).
        return 100 * 1024 * 1024, 64 * 1024 * 1024, False
    # Conservative default (covers v7x: 64 MiB physical / 32 MiB scoped, two
    # TensorCores that want >= 2 balanced parallel grid steps).
    return 32 * 1024 * 1024, 24 * 1024 * 1024, True


def _choose_batch_block(B, A, C, S, x_itemsize, a_itemsize, budget_bytes,
                        prefer_multi_step):
    """Batch elements per grid step.

    Legal values: bblk == B (block dims equal full array dims) or a multiple of
    8 that divides B (keeps the sublane dims of the packed 2-D blocks divisible
    by 8).  Footprint estimate is padding-aware (sublane->8, lane->128) and
    includes the double-buffered pipeline plus f32 softmax temporaries.
    """
    S_pad = _round_up(S, 128)

    def step_bytes(bblk):
        x_blk = _round_up(bblk * C, 8) * S_pad * x_itemsize
        a_blk = _round_up(bblk * A, 8) * S_pad * a_itemsize
        p_blk = _round_up(bblk, 8) * _round_up(A * C, 128) * x_itemsize
        io = x_blk + 2 * a_blk + p_blk          # x in, attn in+out, pooled out
        tmp = 2 * _round_up(bblk * A, 8) * S_pad * 4   # f32 softmax temporaries
        return 2 * io + tmp                      # x2: double-buffered pipeline

    cands = sorted({d for d in range(8, B + 1, 8) if B % d == 0} | {B})
    fitting = [d for d in cands if step_bytes(d) <= budget_bytes]
    if not fitting:
        # Nothing fits the budget: take the smallest legal block.
        # TODO(synk): a remainder-handling grid would allow non-divisor blocks
        # for awkward B (e.g. B=34) whose only legal choice here is B itself.
        return cands[0]
    if prefer_multi_step:
        even = [d for d in fitting if (B // d) >= 2 and (B // d) % 2 == 0]
        if even:
            return max(even)
        multi = [d for d in fitting if (B // d) >= 2]
        if multi:
            return max(multi)
    return max(fitting)


def attention_pool(x, attn_raw, scale=1.0):
    """x: (B, C, H, W), attn_raw: (B, A, H, W) ->
       (pooled (B, A*C), attn (B, A, H, W)) -- matches AttentionPool.forward."""
    B, C, H, W = x.shape
    Ba, A, Ha, Wa = attn_raw.shape
    assert (B, H, W) == (Ba, Ha, Wa)
    S = H * W

    x_flat = x.reshape(B * C, S)            # sublane-dense, contiguous DMA
    attn_flat = attn_raw.reshape(B * A, S)  # sublane-packed rows for softmax

    vmem_limit, budget, prefer_multi = _vmem_config()
    bblk = _choose_batch_block(B, A, C, S,
                               jnp.dtype(x.dtype).itemsize,
                               jnp.dtype(attn_raw.dtype).itemsize,
                               budget, prefer_multi)
    grid = (B // bblk,)

    kernel = functools.partial(_attention_pool_kernel,
                               scale=scale, bblk=bblk,
                               num_attn=A, num_chan=C)

    pooled, attn = pl.pallas_call(
        kernel,
        out_shape=(
            jax.ShapeDtypeStruct((B, A * C), x.dtype),       # lane-dense pooled
            jax.ShapeDtypeStruct((B * A, S), attn_raw.dtype),
        ),
        grid=grid,
        in_specs=[
            pl.BlockSpec((bblk * C, S), lambda b: (b, 0)),
            pl.BlockSpec((bblk * A, S), lambda b: (b, 0)),
        ],
        out_specs=(
            pl.BlockSpec((bblk, A * C), lambda b: (b, 0)),
            pl.BlockSpec((bblk * A, S), lambda b: (b, 0)),
        ),
        compiler_params=pltpu.CompilerParams(
            dimension_semantics=("parallel",),
            vmem_limit_bytes=vmem_limit,
        ),
    )(x_flat, attn_flat)

    return pooled, attn.reshape(B, A, H, W)


def _reference(x, attn_raw, scale=1.0):
    """Plain-JAX reference matching the PyTorch module."""
    B, C, H, W = x.shape
    A = attn_raw.shape[1]
    a = (attn_raw * scale).reshape(B, A, -1)
    attn = jax.nn.softmax(a, axis=2).reshape(B, A, H, W)
    pooled = jnp.einsum('bcwh,bawh->bac', x, attn).reshape(B, -1)
    return pooled, attn


if __name__ == "__main__":
    key = jax.random.PRNGKey(0)
    kx, ka = jax.random.split(key)

    B, C, A, H, W = 2, 4, 3, 16, 16
    scale = 0.7

    x = jax.random.normal(kx, (B, C, H, W), dtype=jnp.float32)
    attn_raw = jax.random.normal(ka, (B, A, H, W), dtype=jnp.float32)

    pooled, attn = attention_pool(x, attn_raw, scale=scale)
    pooled = jax.block_until_ready(pooled)
    attn = jax.block_until_ready(attn)

    pooled_ref, attn_ref = _reference(x, attn_raw, scale=scale)

    assert pooled.shape == (B, A * C)
    assert attn.shape == (B, A, H, W)
    assert jnp.allclose(attn, attn_ref, atol=1e-4, rtol=1e-4)
    assert jnp.allclose(pooled, pooled_ref, atol=1e-3, rtol=1e-3)

    print("KERNEL_OK")
</pallas_src>

<mosaic_0001>
module attributes {stable_mosaic.version = 11 : i64} {
  func.func @_attention_pool_kernel(%arg0: i32, %arg1: memref<8x256xf32, #tpu.memory_space<vmem>>, %arg2: memref<6x256xf32, #tpu.memory_space<vmem>>, %arg3: memref<2x12xf32, #tpu.memory_space<vmem>>, %arg4: memref<6x256xf32, #tpu.memory_space<vmem>>) attributes {dimension_semantics = [#tpu.dimension_semantics<parallel>], iteration_bounds = array<i64: 1>, scalar_prefetch = 0 : i64, scratch_operands = 0 : i64, tpu.core_type = #tpu.core_type<tc>, window_params = [{transform_indices = @transform_0, window_bounds = array<i64: 8, 256>}, {transform_indices = @transform_1, window_bounds = array<i64: 6, 256>}, {transform_indices = @transform_2, window_bounds = array<i64: 2, 12>}, {transform_indices = @transform_3, window_bounds = array<i64: 6, 256>}]} {
    %c0 = arith.constant 0 : index
    %c0_0 = arith.constant 0 : index
    %0 = vector.load %arg2[%c0, %c0_0] : memref<6x256xf32, #tpu.memory_space<vmem>>, vector<6x256xf32>
    %cst = arith.constant 0.699999988 : f32
    %1 = vector.broadcast %cst : f32 to vector<6x256xf32>
    %2 = arith.mulf %0, %1 : vector<6x256xf32>
    %cst_1 = arith.constant dense<0xFF800000> : vector<6xf32>
    %3 = vector.multi_reduction <maximumf>, %2, %cst_1 [1] : vector<6x256xf32> to vector<6xf32>
    %4 = vector.shape_cast %3 : vector<6xf32> to vector<6x1xf32>
    %5 = vector.broadcast %4 : vector<6x1xf32> to vector<6x256xf32>
    %6 = arith.subf %2, %5 : vector<6x256xf32>
    %7 = math.exp %6 : vector<6x256xf32>
    %cst_2 = arith.constant dense<0.000000e+00> : vector<6xf32>
    %8 = vector.multi_reduction <add>, %7, %cst_2 [1] : vector<6x256xf32> to vector<6xf32>
    %9 = vector.shape_cast %8 : vector<6xf32> to vector<6x1xf32>
    %10 = vector.broadcast %9 : vector<6x1xf32> to vector<6x256xf32>
    %11 = arith.divf %7, %10 : vector<6x256xf32>
    %c0_3 = arith.constant 0 : index
    %c0_4 = arith.constant 0 : index
    %12 = vector.load %arg4[%c0_3, %c0_4] : memref<6x256xf32, #tpu.memory_space<vmem>>, vector<6x256xf32>
    tpu.vector_store %arg4[%c0_3, %c0_4], %11 {strides = array<i32>} : memref<6x256xf32, #tpu.memory_space<vmem>>, vector<6x256xf32>,
    %13 = vector.shape_cast %11 : vector<6x256xf32> to vector<2x3x256xf32>
    %c0_5 = arith.constant 0 : index
    %c0_6 = arith.constant 0 : index
    %14 = vector.load %arg1[%c0_5, %c0_6] : memref<8x256xf32, #tpu.memory_space<vmem>>, vector<8x256xf32>
    %15 = vector.shape_cast %14 : vector<8x256xf32> to vector<2x4x256xf32>
    "tpu.trace_start"() <{level = 10 : i32, message = "bas,bcs->bac"}> : () -> ()
    %cst_7 = arith.constant dense<0.000000e+00> : vector<2x3x4xf32>
    %16 = tpu.matmul %13, %15, %cst_7 {dimension_numbers = #tpu.dot_dimension_numbers<[2], [2], [1], [1], [0, 0, 0, 1, 1, 1], [0], [0]>} : vector<2x3x256xf32>, vector<2x4x256xf32>, vector<2x3x4xf32> -> vector<2x3x4xf32>
    "tpu.trace_stop"() : () -> ()
    %17 = vector.shape_cast %16 : vector<2x3x4xf32> to vector<2x12xf32>
    %c0_8 = arith.constant 0 : index
    %c0_9 = arith.constant 0 : index
    %18 = vector.load %arg3[%c0_8, %c0_9] : memref<2x12xf32, #tpu.memory_space<vmem>>, vector<2x12xf32>
    tpu.vector_store %arg3[%c0_8, %c0_9], %17 {strides = array<i32>} : memref<2x12xf32, #tpu.memory_space<vmem>>, vector<2x12xf32>,
    return
  }
  func.func @transform_0(%arg0: i32) -> (i32, i32) {
    %c0_i32 = arith.constant 0 : i32
    %c0_i32_0 = arith.constant 0 : i32
    return %arg0, %c0_i32 : i32, i32
  }
  func.func @transform_1(%arg0: i32) -> (i32, i32) {
    %c0_i32 = arith.constant 0 : i32
    %c0_i32_0 = arith.constant 0 : i32
    return %arg0, %c0_i32 : i32, i32
  }
  func.func @transform_2(%arg0: i32) -> (i32, i32) {
    %c0_i32 = arith.constant 0 : i32
    %c0_i32_0 = arith.constant 0 : i32
    return %arg0, %c0_i32 : i32, i32
  }
  func.func @transform_3(%arg0: i32) -> (i32, i32) {
    %c0_i32 = arith.constant 0 : i32
    %c0_i32_0 = arith.constant 0 : i32
    return %arg0, %c0_i32 : i32, i32
  }
}

</mosaic_0001>

<llo_original>
// kernel: tpu_custom_call.1
$region0: #{tpu_custom_call.1}
  #allocation0 [shape = 'u32[]', space=smem, size = 0x4, offset = 0x4, fixed_abs, tag = 'smem constant byte address 0x4 - core index']
  #allocation1 [shape = 'u32[72,128]{1,0:T(1,128)}', space=vmem, size = 0x9000, scoped, tag = 'internal scratch']
  %s0 = inlined_call_operand.hbm [shape: f32[8,256], index: 0, kind: input, shape index: {}]
  %s1 = inlined_call_operand.hbm [shape: f32[6,256], index: 1, kind: input, shape index: {}]
  %s2 = inlined_call_operand.hbm [shape: f32[2,12], index: 2, kind: output, shape index: {0}]
  %s3 = inlined_call_operand.hbm [shape: f32[6,256], index: 3, kind: output, shape index: {1}]
  %4 = xla_tuple %s2, %s3
  %s5 = sld [smem:[#allocation0]]
  $region34: #{tpu_custom_call.1} parent=0
    _
  %s7 = ssub.s32 1, %s5
  %s8 = scalar_select 0, %s7, %s5
  $region1: #{tpu_custom_call.1} parent=0
    #allocation2 [shape = 'u8[8192]{0}', space=vmem, size = 0x2000, scoped, tag = 'input window, operand 0, single buffered']
    #allocation3 [shape = 's32[1]{0}', space=sflag, size = 0x4, scoped, tag = 'scoped memory for tpu_custom_call.1']
    #allocation4 [shape = 's32[1]{0}', space=sflag, size = 0x4, scoped, tag = 'scoped memory for tpu_custom_call.1']
    #allocation5 [shape = 'u8[8192]{0}', space=vmem, size = 0x2000, scoped, tag = 'input window, operand 1, single buffered']
    #allocation6 [shape = 's32[1]{0}', space=sflag, size = 0x4, scoped, tag = 'scoped memory for tpu_custom_call.1']
    #allocation7 [shape = 'u8[1024]{0}', space=vmem, size = 0x400, scoped, tag = 'output window, operand 0, single buffered']
    #allocation8 [shape = 'u8[8192]{0}', space=vmem, size = 0x2000, scoped, tag = 'output window, operand 1, single buffered']
    #allocation9 [shape = 's32[1]{0}', space=sflag, size = 0x4, scoped, tag = 'scoped memory for tpu_custom_call.1']
    %9 = vsyncpa [#allocation3], 0
    %10 = vsyncpa [#allocation6], 0
    %11 = vsyncpa [#allocation4], 0
    %12 = vsyncpa [#allocation9], 0
    // Predicated region
    $region2: #{tpu_custom_call.1} parent=1 // pred_check
      _
    $region3: #{tpu_custom_call.1} parent=1 // pred_check_branch
      %14 = sbr.rel (0) target = $region5
    $region4: #{tpu_custom_call.1} parent=1 // pred_region
      %16 = vsyncadd [#allocation3], 0
      %s18 = sshll.u32 %s0, 4
      %s19 = int_to_ptr.hbm [resolvable:$true] %s18
      %s20 = sshll.u32 [#allocation2], 4
      %s21 = int_to_ptr.vmem [resolvable:$true] %s20
      %23 = dma.hbm_to_vmem [thread:$0]  %s19, 256, %s21, [#allocation3]
    $region5: #{tpu_custom_call.1} parent=1 // pred_fallthru
      _
    // Predicated region
    $region6: #{tpu_custom_call.1} parent=1 // pred_check
      _
    $region7: #{tpu_custom_call.1} parent=1 // pred_check_branch
      %25 = sbr.rel (0) target = $region9
    $region8: #{tpu_custom_call.1} parent=1 // pred_region
      %27 = vsyncadd [#allocation6], 0
      %s29 = sshll.u32 %s1, 4
      %s30 = int_to_ptr.hbm [resolvable:$true] %s29
      %s31 = sshll.u32 [#allocation5], 4
      %s32 = int_to_ptr.vmem [resolvable:$true] %s31
      %34 = dma.hbm_to_vmem [thread:$0]  %s30, 256, %s32, [#allocation6]
    $region9: #{tpu_custom_call.1} parent=1 // pred_fallthru
      _
    // Predicated region
    $region10: #{tpu_custom_call.1} parent=1 // pred_check
      _
    $region11: #{tpu_custom_call.1} parent=1 // pred_check_branch
      %36 = sbr.rel (0) target = $region13
    $region12: #{tpu_custom_call.1} parent=1 // pred_region
      %38 = dma.done [#allocation3], 256
    $region13: #{tpu_custom_call.1} parent=1 // pred_fallthru
      _
    // Predicated region
    $region14: #{tpu_custom_call.1} parent=1 // pred_check
      _
    $region15: #{tpu_custom_call.1} parent=1 // pred_check_branch
      %40 = sbr.rel (0) target = $region17
    $region16: #{tpu_custom_call.1} parent=1 // pred_region
      %42 = dma.done [#allocation6], 256
    $region17: #{tpu_custom_call.1} parent=1 // pred_fallthru
      _
    %v43 = vld [vmem:[#allocation5] sm:$0x3f]
    %v44 = vld [vmem:[#allocation5 + $0x8] sm:$0x3f]
    %v45 = vmul.f32 %v43, 0.7
    %v46 = vmul.f32 %v44, 0.7
    %vm47 = vcmask 1045504
    %v48 = vsel %vm47, %v45, -inf
    %v49 = vsel %vm47, %v46, -inf
    %v50 = vmax.f32 %v48, %v49
    %51 = vmax.xlane.f32.xlu0 %v50
    %v52 = vpop.xlane.xlu0 %51
    %v53 = vsub.f32 %v45, %v52
    %v54 = vsub.f32 %v46, %v52
    %v55 = vmul.f32 %v53, 1.442695
    %v56 = vpow.pop %v55
    %v57 = vmul.f32 %v54, 1.442695
    %v58 = vpow.pop %v57
    %v59 = vsel %vm47, %v56, 0.0
    %v60 = vsel %vm47, %v58, 0.0
    %v61 = vadd.f32 %v59, %v60
    %62 = vadd.xlane.f32.xlu0 %v61
    %v63 = vpop.xlane.xlu0 %62
    %v64 = vrcp.pop %v63
    %v65 = vmul.f32 %v63, %v64
    %v66 = vsub.f32 1.0, %v65
    %v67 = vmul.f32 %v64, %v66
    %v68 = vadd.f32 %v64, %v67
    %vm69 = vweird.f32 %v63
    %vm70 = vweird.f32 %v64
    %vm71 = vmor %vm69, %vm70
    %v72 = vsel %vm71, %v64, %v68
    %v73 = vand.u32 2147483647, %v63
    %vm74 = vcmp.eq.f32.partialorder %v73, 8.507059e+37
    %v75 = vand.u32 %v63, 2147483648
    %v76 = vor.u32 1.1754944e-38, %v75
    %v77 = vsel %vm74, %v76, %v72
    %v78 = vmul.f32 %v56, %v77
    %v79 = vmul.f32 %v58, %v77
    %80 = vst [vmem:[#allocation8] sm:$0x3f] %v78
    %81 = vst [vmem:[#allocation8 + $0x8] sm:$0x3f] %v79
    %v84 = vrot.slane %v79, 7
    %vm85 = vcmask 1040384
    %v86 = vsel %vm85, %v78, %v84
    %vm87 = vcmask 1041409
    %v88 = vsel %vm87, %v78, %v84
    %v89 = vrot.slane %v88, 1
    %vm90 = vcmask 1042434
    %v91 = vsel %vm90, %v78, %v84
    %v92 = vrot.slane %v91, 2
    %vm93 = vcmask 1043459
    %v94 = vsel %vm93, %v78, %v84
    %v95 = vrot.slane %v94, 3
    %vm96 = vcmask 1044484
    %v97 = vsel %vm96, %v78, %v84
    %v98 = vrot.slane %v97, 4
    %vm99 = vcmask 1045509
    %v100 = vsel %vm99, %v78, %v84
    %v101 = vrot.slane %v100, 5
    %v102 = vld [vmem:[#allocation2] sm:$0xff]
    %v103 = vld [vmem:[#allocation2 + $0x8] sm:$0xff]
    %v106 = vrot.slane %v103, 4
    %vm107 = vcmask 1043456
    %v108 = vsel %vm107, %v102, %v106
    %v109 = vsel %vm107, %v106, %v102
    %v110 = vrot.slane %v109, 4
    %111 = vst [vmem:[#allocation1] ss:$9 sm:$0xff] %v86
    %s112 = scalar_lea.vmem [#allocation1], 1
    %113 = vst [vmem:[%s112] ss:$9 sm:$0xff] %v89
    %s114 = scalar_lea.vmem [#allocation1], 2
    %115 = vst [vmem:[%s114] ss:$9 sm:$0xff] %v92
    %v116 = vld [vmem:[#allocation1] sm:$0xff]
    %v117 = vld [vmem:[#allocation1 + $0x9] sm:$0xff]
    %120 = vst [vmem:[#allocation1] ss:$2 sm:$0xff] %v108
    %v121 = vld.sshfl [vmem:[#allocation1] sm:$0xff pattern:$0x75316420]
    %v122 = vld.sshfl [vmem:[#allocation1 + $0x8] sm:$0xff pattern:$0x75316420]
    %125 = vmatpush.xpose.msra.mxu0 0.0
    %126 = vmatpush.xpose.msra.mxu0 0.0
    %127 = vmatpush.xpose.msra.mxu0 0.0
    %128 = vmatpush.xpose.msra.mxu0 0.0
    %129 = vmatpush.xpose.msra.mxu0 0.0
    %130 = vmatpush.xpose.msra.mxu0 0.0
    %131 = vmatpush.xpose.msra.mxu0 0.0
    %132 = vmatpush.xpose.msra.mxu0 0.0
    %133 = vmatpush.xpose.msra.mxu0 0.0
    %134 = vmatpush.xpose.msra.mxu0 0.0
    %135 = vmatpush.xpose.msra.mxu0 0.0
    %136 = vmatpush.xpose.msra.mxu0 0.0
    %137 = vmatpush.xpose.msra.mxu0 0.0
    %138 = vmatpush.xpose.msra.mxu0 0.0
    %139 = vmatpush.xpose.msra.mxu0 0.0
    %140 = vmatpush.xpose.msra.mxu0 %v121
    %141 = vmatmul.f32.gmra.mxu0 %v116
    %v142 = vpop.f32.mrf.mxu0
    %v143 = vadd.f32 0.0, %v142
    %144 = vdwg.mxu0
    %145 = vmatpush.xpose.msra.mxu0 0.0
    %146 = vmatpush.xpose.msra.mxu0 0.0
    %147 = vmatpush.xpose.msra.mxu0 0.0
    %148 = vmatpush.xpose.msra.mxu0 0.0
    %149 = vmatpush.xpose.msra.mxu0 0.0
    %150 = vmatpush.xpose.msra.mxu0 0.0
    %151 = vmatpush.xpose.msra.mxu0 0.0
    %152 = vmatpush.xpose.msra.mxu0 0.0
    %153 = vmatpush.xpose.msra.mxu0 0.0
    %154 = vmatpush.xpose.msra.mxu0 0.0
    %155 = vmatpush.xpose.msra.mxu0 0.0
    %156 = vmatpush.xpose.msra.mxu0 0.0
    %157 = vmatpush.xpose.msra.mxu0 0.0
    %158 = vmatpush.xpose.msra.mxu0 0.0
    %159 = vmatpush.xpose.msra.mxu0 0.0
    %160 = vmatpush.xpose.msra.mxu0 %v122
    %161 = vmatmul.f32.gmra.mxu0 %v117
    %v162 = vpop.f32.mrf.mxu0
    %v163 = vadd.f32 %v143, %v162
    %164 = vdwg.mxu0
    %165 = vst [vmem:[#allocation1] ss:$9 sm:$0xff] %v95
    %s166 = scalar_lea.vmem [#allocation1], 1
    %167 = vst [vmem:[%s166] ss:$9 sm:$0xff] %v98
    %s168 = scalar_lea.vmem [#allocation1], 2
    %169 = vst [vmem:[%s168] ss:$9 sm:$0xff] %v101
    %v170 = vld [vmem:[#allocation1] sm:$0xff]
    %v171 = vld [vmem:[#allocation1 + $0x9] sm:$0xff]
    %174 = vst [vmem:[#allocation1] ss:$2 sm:$0xff] %v110
    %v175 = vld.sshfl [vmem:[#allocation1] sm:$0xff pattern:$0x75316420]
    %v176 = vld.sshfl [vmem:[#allocation1 + $0x8] sm:$0xff pattern:$0x75316420]
    %179 = vmatpush.xpose.msra.mxu0 0.0
    %180 = vmatpush.xpose.msra.mxu0 0.0
    %181 = vmatpush.xpose.msra.mxu0 0.0
    %182 = vmatpush.xpose.msra.mxu0 0.0
    %183 = vmatpush.xpose.msra.mxu0 0.0
    %184 = vmatpush.xpose.msra.mxu0 0.0
    %185 = vmatpush.xpose.msra.mxu0 0.0
    %186 = vmatpush.xpose.msra.mxu0 0.0
    %187 = vmatpush.xpose.msra.mxu0 0.0
    %188 = vmatpush.xpose.msra.mxu0 0.0
    %189 = vmatpush.xpose.msra.mxu0 0.0
    %190 = vmatpush.xpose.msra.mxu0 0.0
    %191 = vmatpush.xpose.msra.mxu0 0.0
    %192 = vmatpush.xpose.msra.mxu0 0.0
    %193 = vmatpush.xpose.msra.mxu0 0.0
    %194 = vmatpush.xpose.msra.mxu0 %v175
    %195 = vmatmul.f32.gmra.mxu0 %v170
    %v196 = vpop.f32.mrf.mxu0
    %v197 = vadd.f32 0.0, %v196
    %198 = vdwg.mxu0
    %199 = vmatpush.xpose.msra.mxu0 0.0
    %200 = vmatpush.xpose.msra.mxu0 0.0
    %201 = vmatpush.xpose.msra.mxu0 0.0
    %202 = vmatpush.xpose.msra.mxu0 0.0
    %203 = vmatpush.xpose.msra.mxu0 0.0
    %204 = vmatpush.xpose.msra.mxu0 0.0
    %205 = vmatpush.xpose.msra.mxu0 0.0
    %206 = vmatpush.xpose.msra.mxu0 0.0
    %207 = vmatpush.xpose.msra.mxu0 0.0
    %208 = vmatpush.xpose.msra.mxu0 0.0
    %209 = vmatpush.xpose.msra.mxu0 0.0
    %210 = vmatpush.xpose.msra.mxu0 0.0
    %211 = vmatpush.xpose.msra.mxu0 0.0
    %212 = vmatpush.xpose.msra.mxu0 0.0
    %213 = vmatpush.xpose.msra.mxu0 0.0
    %214 = vmatpush.xpose.msra.mxu0 %v176
    %215 = vmatmul.f32.gmra.mxu0 %v171
    %v216 = vpop.f32.mrf.mxu0
    %v217 = vadd.f32 %v197, %v216
    %218 = vdwg.mxu0
    %v220 = vunpack.c.l.s4 1983009808
    %v221 = vunpack.c.0.s8 %v220
    %v222 = vperm.slane %v163, %v221
    %v224 = vunpack.c.l.s4 1983009808
    %v225 = vunpack.c.0.s8 %v224
    %v226 = vperm.slane %v217, %v225
    %v227 = vrot.slane %v226, 4
    %vm228 = vcmask 1047556
    %v229 = vsel %vm228, %v227, %v222
    %v230 = vrot.slane %v222, 4
    %v231 = vsel %vm228, %v226, %v230
    %v233 = vunpack.c.l.s4 1934713408
    %v234 = vunpack.c.0.s8 %v233
    %v235 = vperm.slane %v229, %v234
    %v236 = vrot.slane %v235, 4
    %v237 = vsel %vm228, 0.0, %v236
    %v239 = vunpack.c.l.s4 1934713408
    %v240 = vunpack.c.0.s8 %v239
    %v241 = vperm.slane %v231, %v240
    %243 = vrot.lane.b32.xlu0 %v237, 4
    %v244 = vpop.permute.xlu0 %243
    %247 = vrot.lane.b32.xlu0 %v241, 8
    %v248 = vpop.permute.xlu0 %247
    %vm250 = vcmask 31744
    %v251 = vsel %vm250, %v235, %v244
    %vm252 = vcmask 64512
    %v253 = vsel %vm252, %v251, %v248
    %vm254 = vcmask 91136
    %255 = vst.msk [vmem:[#allocation7] sm:$0x3] %vm254, %v253
    // Predicated region
    $region18: #{tpu_custom_call.1} parent=1 // pred_check
      _
    $region19: #{tpu_custom_call.1} parent=1 // pred_check_branch
      %257 = sbr.rel (0) target = $region21
    $region20: #{tpu_custom_call.1} parent=1 // pred_region
      %259 = vsyncadd [#allocation4], 0
      %s261 = sshll.u32 [#allocation7], 4
      %s262 = int_to_ptr.vmem [resolvable:$true] %s261
      %s263 = sshll.u32 %s2, 4
      %s264 = int_to_ptr.hbm [resolvable:$true] %s263
      %266 = dma.vmem_to_hbm [thread:$0]  %s262, 32, %s264, [#allocation4]
    $region21: #{tpu_custom_call.1} parent=1 // pred_fallthru
      _
    // Predicated region
    $region22: #{tpu_custom_call.1} parent=1 // pred_check
      _
    $region23: #{tpu_custom_call.1} parent=1 // pred_check_branch
      %268 = sbr.rel (0) target = $region25
    $region24: #{tpu_custom_call.1} parent=1 // pred_region
      %270 = vsyncadd [#allocation9], 0
      %s272 = sshll.u32 [#allocation8], 4
      %s273 = int_to_ptr.vmem [resolvable:$true] %s272
      %s274 = sshll.u32 %s3, 4
      %s275 = int_to_ptr.hbm [resolvable:$true] %s274
      %277 = dma.vmem_to_hbm [thread:$0]  %s273, 256, %s275, [#allocation9]
    $region25: #{tpu_custom_call.1} parent=1 // pred_fallthru
      _
    // Predicated region
    $region26: #{tpu_custom_call.1} parent=1 // pred_check
      _
    $region27: #{tpu_custom_call.1} parent=1 // pred_check_branch
      %279 = sbr.rel (0) target = $region29
    $region28: #{tpu_custom_call.1} parent=1 // pred_region
      %281 = dma.done [#allocation4], 32
    $region29: #{tpu_custom_call.1} parent=1 // pred_fallthru
      _
    // Predicated region
    $region30: #{tpu_custom_call.1} parent=1 // pred_check
      _
    $region31: #{tpu_custom_call.1} parent=1 // pred_check_branch
      %283 = sbr.rel (0) target = $region33
    $region32: #{tpu_custom_call.1} parent=1 // pred_region
      %285 = dma.done [#allocation9], 256
    $region33: #{tpu_custom_call.1} parent=1 // pred_fallthru
      _
    %286 = vsyncpa [#allocation3], 1
    %287 = vsyncpa [#allocation6], 1
    %288 = vsyncpa [#allocation4], 1
    %289 = vsyncpa [#allocation9], 1

</llo_original>
